<compile_context>
chip_gen: v6e
topology: v6e:2x2x1
jax: 0.10.0
libtpu: 0.0.40
codegen_flags: <defaults>
</compile_context>

<pallas_src>
import jax
import jax.numpy as jnp
from jax.experimental import pallas as pl
from jax.experimental.pallas import tpu as pltpu


def _round_up(x, m):
    return ((x + m - 1) // m) * m


def _vmem_capacity_bytes():
    try:
        info = pltpu.get_tpu_info()
        cap = getattr(info, "vmem_capacity_bytes", None)
        if cap:
            return int(cap)
    except Exception:
        pass
    return 64 << 20  # conservative fallback (v7x per-TC VMEM)


def _vmem_tile_bytes(shape, itemsize):
    """Rough padded VMEM footprint of one buffer (lane->128, sublane->8)."""
    dims = list(shape)
    dims[-1] = _round_up(dims[-1], 128)
    if len(dims) >= 2:
        dims[-2] = _round_up(dims[-2], 8)
    n = 1
    for d in dims:
        n *= int(d)
    return n * itemsize


# ----------------------------- Pallas kernel ------------------------------ #
def moe_dnn_kernel(idT_ref, valT_ref, w0e_ref, b0_ref, wh_ref, bh_ref, wo_ref, bo_ref, o_ref):
    # idT_ref : (nfield, TB) int32  — feature ids, batch on lanes
    # valT_ref: (nfield, TB) cdt    — feature values, batch on lanes
    # w0e_ref : (nfield, H, nfeat_pad) cdt — layer-0 weight with the emb table folded in
    # b0_ref  : (H, 1) cdt
    # wh_ref  : (Lh, H, H) cdt      — folded hidden-layer weights (out, in)
    # bh_ref  : (Lh, H, 1) cdt
    # wo_ref  : (1, H) cdt          — output head
    # bo_ref  : (1,) f32 SMEM scalar
    # o_ref   : (1, TB) f32         — lane-dense output row
    nfield, H, nfeat_pad = w0e_ref.shape
    Lh = wh_ref.shape[0]
    cdt = w0e_ref.dtype
    tb = idT_ref.shape[1]

    ids = idT_ref[...]
    vals = valT_ref[...]

    # --- layer 0 fused with embedding: value-scaled one-hot gather done on the MXU ---
    feat_iota = jax.lax.broadcasted_iota(jnp.int32, (nfeat_pad, 1), 0)
    acc = jnp.zeros((H, tb), jnp.float32)
    for f in range(nfield):                                   # nfield is small & static
        onehot = feat_iota == ids[f:f + 1, :]                 # (nfeat_pad, TB) bool
        s_f = jnp.where(onehot, vals[f:f + 1, :], jnp.zeros((), cdt))  # scaled one-hot (cdt)
        acc = acc + jnp.dot(w0e_ref[f], s_f, preferred_element_type=jnp.float32)
    # bias-add + ReLU in the compute dtype (bf16 on v6e/v7x; f32 when compute_dtype=f32)
    h = jnp.maximum(acc.astype(cdt) + b0_ref[...], 0)         # (H, TB) cdt

    # --- remaining hidden MOE layers (Lh small & static -> unrolled) ---
    for l in range(Lh):
        z = jnp.dot(wh_ref[l], h, preferred_element_type=jnp.float32)
        h = jnp.maximum(z.astype(cdt) + bh_ref[l], 0)

    # --- output head: (1, H) @ (H, TB) + bo  -> lane-dense row ---
    y = jnp.dot(wo_ref[...], h, preferred_element_type=jnp.float32)
    o_ref[...] = (y + bo_ref[0]).astype(o_ref.dtype)


def moe_mlp_pallas(idT, valT, w0e, b0c, whc, bhc, woT, bo, *, tb=None):
    """idT/valT: (nfield, B). Returns f32 (B,)."""
    nfield, B = idT.shape
    _, H, nfeat_pad = w0e.shape
    Lh = whc.shape[0]
    assert Lh >= 1, "moe_num_layers must be >= 2 for this kernel layout"

    phys = _vmem_capacity_bytes()

    # Batch tile: bigger lane tiles on 128 MiB-VMEM parts (v5e/v6e), 512 default on v7x.
    if tb is None:
        tb = 1024 if phys >= (100 << 20) else 512
    tb = max(128, _round_up(tb, 128))
    if B > 128:
        # Ensure >= 2 grid steps so both v7x TensorCores get work under "parallel".
        tb_eff = min(tb, max(128, _round_up(-(-B // 2), 128)))
    else:
        tb_eff = 128
    B_pad = _round_up(B, tb_eff)
    if B_pad != B:
        idT = jnp.pad(idT, ((0, 0), (0, B_pad - B)))     # pad ids with 0 (valid row)
        valT = jnp.pad(valT, ((0, 0), (0, B_pad - B)))   # pad values with 0 -> zero activations
    grid = (B_pad // tb_eff,)

    # --- derive vmem_limit_bytes from the actual budget ---
    csz = jnp.dtype(w0e.dtype).itemsize
    weight_bytes = (_vmem_tile_bytes((nfield, H, nfeat_pad), csz)     # single-buffered
                    + _vmem_tile_bytes((H, 1), csz)
                    + _vmem_tile_bytes((Lh, H, H), csz)
                    + _vmem_tile_bytes((Lh, H, 1), csz)
                    + _vmem_tile_bytes((1, H), csz))
    stream_bytes = 2 * (_vmem_tile_bytes((nfield, tb_eff), 4)         # double-buffered streams
                        + _vmem_tile_bytes((nfield, tb_eff), csz)
                        + _vmem_tile_bytes((1, tb_eff), 4))
    temp_bytes = (_vmem_tile_bytes((nfeat_pad, tb_eff), csz)          # one-hot slab + h temps
                  + 3 * _vmem_tile_bytes((H, tb_eff), 4))
    est = int(1.5 * (weight_bytes + stream_bytes + temp_bytes)) + (4 << 20)
    cap = int(phys * 0.625)                # ~40 MiB on v7x, ~80 MiB on v5e/v6e
    vmem_limit = min(max(est, 32 << 20), cap)
    vmem_limit = max(vmem_limit, est)      # never below what the kernel actually needs

    resident = dict(pipeline_mode=pl.Buffered(1))   # grid-invariant weights: single buffer

    out = pl.pallas_call(
        moe_dnn_kernel,
        out_shape=jax.ShapeDtypeStruct((1, B_pad), jnp.float32),
        grid_spec=pltpu.PrefetchScalarGridSpec(
            num_scalar_prefetch=0,
            grid=grid,
            in_specs=[
                pl.BlockSpec((nfield, tb_eff), lambda i: (0, i)),             # ids (streamed)
                pl.BlockSpec((nfield, tb_eff), lambda i: (0, i)),             # values (streamed)
                pl.BlockSpec((nfield, H, nfeat_pad), lambda i: (0, 0, 0), **resident),
                pl.BlockSpec((H, 1), lambda i: (0, 0), **resident),
                pl.BlockSpec((Lh, H, H), lambda i: (0, 0, 0), **resident),
                pl.BlockSpec((Lh, H, 1), lambda i: (0, 0, 0), **resident),
                pl.BlockSpec((1, H), lambda i: (0, 0), **resident),
                pl.BlockSpec(memory_space=pltpu.MemorySpace.SMEM),            # bo scalar
            ],
            out_specs=pl.BlockSpec((1, tb_eff), lambda i: (0, i)),            # lane-dense row
        ),
        compiler_params=pltpu.CompilerParams(
            dimension_semantics=("parallel",),       # megacore / 2-TC sharding of batch
            vmem_limit_bytes=int(vmem_limit),
        ),
    )(idT, valT, w0e, b0c, whc, bhc, woT, bo)
    return out[0, :B]


# ------------------------------ model glue -------------------------------- #
def init_params(key, nfeat, nfield, nemb, nlayers, nhid, K):
    D0 = nfield * nemb
    k0, k1, k2, k3, k4, k5, k6 = jax.random.split(key, 7)
    return {
        "emb": jax.random.normal(k0, (nfeat, nemb), jnp.float32) * 0.1,
        "w0": jax.random.normal(k1, (K, D0, nhid), jnp.float32) * (1.0 / jnp.sqrt(D0)),
        "b0": jax.random.normal(k4, (K, nhid), jnp.float32) * 0.01,
        "wh": jax.random.normal(k2, (nlayers - 1, K, nhid, nhid), jnp.float32)
              * (1.0 / jnp.sqrt(nhid)),
        "bh": jax.random.normal(k5, (nlayers - 1, K, nhid), jnp.float32) * 0.01,
        "wo": jax.random.normal(k3, (nhid, 1), jnp.float32) * (1.0 / jnp.sqrt(nhid)),
        "bo": jax.random.normal(k6, (1,), jnp.float32) * 0.01,
    }


def prepare_params(params, compute_dtype=jnp.bfloat16):
    """ONE-TIME fold (call once per parameter set and cache the result):
       * experts: arch_weights=None => uniform mean BEFORE ReLU =>
         sum_k(xW_k + b_k)/K == x @ mean_k(W_k) + mean_k(b_k)  (exact algebra)
       * embedding: folded into layer-0 per field: w0e[f] = W0_f^T @ emb^T  (exact algebra)
       * transpose to (out, in) batch-on-lanes layout, cast to the compute dtype.
    NOTE: only valid while arch_weights is None (uniform, data-independent gating)."""
    hp = jax.lax.Precision.HIGHEST
    nfeat, nemb = params["emb"].shape
    _, D0, H = params["w0"].shape
    nfield = D0 // nemb

    w0_eff = jnp.mean(params["w0"], axis=0)                    # (D0, H)
    b0_eff = jnp.mean(params["b0"], axis=0)                    # (H,)
    wh_eff = jnp.mean(params["wh"], axis=1)                    # (Lh, H, H) (in, out)
    bh_eff = jnp.mean(params["bh"], axis=1)                    # (Lh, H)

    w0r = w0_eff.reshape(nfield, nemb, H)
    w0e = jnp.einsum("feh,ne->fhn", w0r, params["emb"], precision=hp)  # (nfield, H, nfeat)
    nfeat_pad = _round_up(nfeat, 8)
    if nfeat_pad != nfeat:
        w0e = jnp.pad(w0e, ((0, 0), (0, 0), (0, nfeat_pad - nfeat)))

    return {
        "w0e": w0e.astype(compute_dtype),                              # (nfield, H, nfeat_pad)
        "b0c": b0_eff[:, None].astype(compute_dtype),                  # (H, 1)
        "whc": jnp.transpose(wh_eff, (0, 2, 1)).astype(compute_dtype), # (Lh, H_out, H_in)
        "bhc": bh_eff[..., None].astype(compute_dtype),                # (Lh, H, 1)
        "woT": jnp.transpose(params["wo"]).astype(compute_dtype),      # (1, H)
        "bo": params["bo"].reshape(1).astype(jnp.float32),             # (1,)
    }


def moe_dnn_forward(folded, x_id, x_value, *, tb=None):
    """x_id: int32 (B, nfield); x_value: float32 (B, nfield) -> y: float32 (B,).
    `folded` is the cached output of prepare_params (fold hoisted out of the forward)."""
    cdt = folded["w0e"].dtype
    idT = x_id.T.astype(jnp.int32)     # (nfield, B) — only remaining per-call glue (tiny)
    valT = x_value.T.astype(cdt)       # (nfield, B)
    return moe_mlp_pallas(idT, valT, folded["w0e"], folded["b0c"], folded["whc"],
                          folded["bhc"], folded["woT"], folded["bo"], tb=tb)


def moe_dnn_reference(params, x_id, x_value):
    """Pure-JAX reference mirroring the PyTorch module (per-expert mean, high precision)."""
    B = x_id.shape[0]
    hp = jax.lax.Precision.HIGHEST
    x = (params["emb"][x_id] * x_value[..., None]).reshape(B, -1)
    h = jnp.maximum(
        jnp.mean(jnp.einsum("bd,kdh->kbh", x, params["w0"], precision=hp)
                 + params["b0"][:, None, :], axis=0), 0.0)
    for l in range(params["wh"].shape[0]):
        h = jnp.maximum(
            jnp.mean(jnp.einsum("bd,kdh->kbh", h, params["wh"][l], precision=hp)
                     + params["bh"][l][:, None, :], axis=0), 0.0)
    y = jnp.dot(h, params["wo"], precision=hp) + params["bo"]
    return y[:, 0]


# --------------------------------- main ------------------------------------ #
if __name__ == "__main__":
    # Config consistent with MoEDNN.__init__:
    #   nfield=4, nfeat=100, nemb=8, moe_num_layers=2, moe_hid_size=32, dropout=0.0, K=2
    B, nfield, nfeat, nemb = 8, 4, 100, 8
    moe_num_layers, moe_hid_size, K = 2, 32, 2

    key = jax.random.PRNGKey(0)
    pkey, ikey, vkey, ikey2, vkey2 = jax.random.split(key, 5)
    params = init_params(pkey, nfeat, nfield, nemb, moe_num_layers, moe_hid_size, K)
    x_id = jax.random.randint(ikey, (B, nfield), 0, nfeat, dtype=jnp.int32)
    x_value = jax.random.uniform(vkey, (B, nfield), jnp.float32)

    y_ref = moe_dnn_reference(params, x_id, x_value)

    # Fold once per parameter set (hoisted / cached), then reuse across forward calls.
    folded_f32 = jax.block_until_ready(
        jax.tree_util.tree_map(jnp.asarray, prepare_params(params, jnp.float32)))
    folded_bf16 = jax.block_until_ready(
        jax.tree_util.tree_map(jnp.asarray, prepare_params(params, jnp.bfloat16)))

    # 1) f32 compute path: exact-semantics check (expert + embedding folds are exact algebra,
    #    tolerance only covers matmul rounding / re-association).
    y32 = jax.block_until_ready(moe_dnn_forward(folded_f32, x_id, x_value))
    assert y32.shape == (B,), y32.shape
    assert jnp.allclose(y32, y_ref, atol=1e-3, rtol=1e-2), (y32, y_ref)

    # 2) bf16 compute path (default perf config for v6e/v7x): loose-tolerance check.
    #    (On v5e — no bf16 VPU — prefer the f32 path above.)
    ybf = jax.block_until_ready(moe_dnn_forward(folded_bf16, x_id, x_value))
    assert ybf.shape == (B,), ybf.shape
    assert jnp.allclose(ybf, y_ref, atol=1e-2, rtol=5e-2), (ybf, y_ref)

    # 3) ragged batch + multi-step parallel grid (exercises padding path; tb=128 -> 3 steps).
    B2 = 300
    x_id2 = jax.random.randint(ikey2, (B2, nfield), 0, nfeat, dtype=jnp.int32)
    x_value2 = jax.random.uniform(vkey2, (B2, nfield), jnp.float32)
    y2 = jax.block_until_ready(moe_dnn_forward(folded_bf16, x_id2, x_value2, tb=128))
    y2_ref = moe_dnn_reference(params, x_id2, x_value2)
    assert y2.shape == (B2,), y2.shape
    assert jnp.allclose(y2, y2_ref, atol=1e-2, rtol=5e-2), (y2, y2_ref)

    # 4) default tile selection path (>=2 grid steps when B > 128, auto tb / vmem budget).
    y3 = jax.block_until_ready(moe_dnn_forward(folded_bf16, x_id2, x_value2))
    assert y3.shape == (B2,), y3.shape
    assert jnp.allclose(y3, y2_ref, atol=1e-2, rtol=5e-2), (y3, y2_ref)

    print("KERNEL_OK")
</pallas_src>

<mosaic_0001>
module attributes {stable_mosaic.version = 11 : i64} {
  func.func @moe_dnn_kernel(%arg0: i32, %arg1: memref<4x128xi32, #tpu.memory_space<vmem>>, %arg2: memref<4x128xf32, #tpu.memory_space<vmem>>, %arg3: memref<4x32x104xf32, #tpu.memory_space<vmem>>, %arg4: memref<32x1xf32, #tpu.memory_space<vmem>>, %arg5: memref<1x32x32xf32, #tpu.memory_space<vmem>>, %arg6: memref<1x32x1xf32, #tpu.memory_space<vmem>>, %arg7: memref<1x32xf32, #tpu.memory_space<vmem>>, %arg8: memref<1xf32, #tpu.memory_space<smem>>, %arg9: memref<1x128xf32, #tpu.memory_space<vmem>>) attributes {dimension_semantics = [#tpu.dimension_semantics<parallel>], iteration_bounds = array<i64: 1>, scalar_prefetch = 0 : i64, scratch_operands = 0 : i64, tpu.core_type = #tpu.core_type<tc>, window_params = [{transform_indices = @transform_0, window_bounds = array<i64: 4, 128>}, {transform_indices = @transform_1, window_bounds = array<i64: 4, 128>}, {pipeline_mode = #tpu.pipeline_mode<synchronous>, transform_indices = @transform_2, window_bounds = array<i64: 4, 32, 104>}, {pipeline_mode = #tpu.pipeline_mode<synchronous>, transform_indices = @transform_3, window_bounds = array<i64: 32, 1>}, {pipeline_mode = #tpu.pipeline_mode<synchronous>, transform_indices = @transform_4, window_bounds = array<i64: 1, 32, 32>}, {pipeline_mode = #tpu.pipeline_mode<synchronous>, transform_indices = @transform_5, window_bounds = array<i64: 1, 32, 1>}, {pipeline_mode = #tpu.pipeline_mode<synchronous>, transform_indices = @transform_6, window_bounds = array<i64: 1, 32>}, {transform_indices = @transform_7, window_bounds = array<i64: 1>}, {transform_indices = @transform_8, window_bounds = array<i64: 1, 128>}]} {
    %c0 = arith.constant 0 : index
    %c0_0 = arith.constant 0 : index
    %0 = vector.load %arg1[%c0, %c0_0] : memref<4x128xi32, #tpu.memory_space<vmem>>, vector<4x128xi32>
    %c0_1 = arith.constant 0 : index
    %c0_2 = arith.constant 0 : index
    %1 = vector.load %arg2[%c0_1, %c0_2] : memref<4x128xf32, #tpu.memory_space<vmem>>, vector<4x128xf32>
    %2 = tpu.iota {dimensions = array<i32: 0>} : vector<104x1xi32>
    %cst = arith.constant 0.000000e+00 : f32
    %3 = vector.broadcast %cst : f32 to vector<32x128xf32>
    %4 = vector.extract_strided_slice %0 {offsets = [0, 0], sizes = [1, 128], strides = [1, 1]} : vector<4x128xi32> to vector<1x128xi32>
    %5 = vector.broadcast %2 : vector<104x1xi32> to vector<104x128xi32>
    %6 = vector.broadcast %4 : vector<1x128xi32> to vector<104x128xi32>
    %7 = arith.cmpi eq, %5, %6 : vector<104x128xi32>
    %8 = vector.extract_strided_slice %1 {offsets = [0, 0], sizes = [1, 128], strides = [1, 1]} : vector<4x128xf32> to vector<1x128xf32>
    %cst_3 = arith.constant 0.000000e+00 : f32
    %9 = vector.shape_cast %8 : vector<1x128xf32> to vector<1x128xf32>
    %10 = vector.broadcast %9 : vector<1x128xf32> to vector<104x128xf32>
    %11 = vector.broadcast %cst_3 : f32 to vector<104x128xf32>
    %12 = arith.select %7, %10, %11 : vector<104x128xi1>, vector<104x128xf32>
    %c0_4 = arith.constant 0 : index
    %c0_5 = arith.constant 0 : index
    %c0_6 = arith.constant 0 : index
    %13 = vector.load %arg3[%c0_4, %c0_5, %c0_6] : memref<4x32x104xf32, #tpu.memory_space<vmem>>, vector<1x32x104xf32>
    %14 = vector.shape_cast %13 : vector<1x32x104xf32> to vector<32x104xf32>
    %cst_7 = arith.constant dense<0.000000e+00> : vector<32x128xf32>
    %15 = tpu.matmul %14, %12, %cst_7 {dimension_numbers = #tpu.dot_dimension_numbers<[1], [0], [0], [1], [0, 0, 1, 1], [], []>} : vector<32x104xf32>, vector<104x128xf32>, vector<32x128xf32> -> vector<32x128xf32>
    %16 = arith.addf %3, %15 : vector<32x128xf32>
    %17 = vector.extract_strided_slice %0 {offsets = [1, 0], sizes = [1, 128], strides = [1, 1]} : vector<4x128xi32> to vector<1x128xi32>
    %18 = vector.broadcast %2 : vector<104x1xi32> to vector<104x128xi32>
    %19 = vector.broadcast %17 : vector<1x128xi32> to vector<104x128xi32>
    %20 = arith.cmpi eq, %18, %19 : vector<104x128xi32>
    %21 = vector.extract_strided_slice %1 {offsets = [1, 0], sizes = [1, 128], strides = [1, 1]} : vector<4x128xf32> to vector<1x128xf32>
    %cst_8 = arith.constant 0.000000e+00 : f32
    %22 = vector.shape_cast %21 : vector<1x128xf32> to vector<1x128xf32>
    %23 = vector.broadcast %22 : vector<1x128xf32> to vector<104x128xf32>
    %24 = vector.broadcast %cst_8 : f32 to vector<104x128xf32>
    %25 = arith.select %20, %23, %24 : vector<104x128xi1>, vector<104x128xf32>
    %c1 = arith.constant 1 : index
    %c0_9 = arith.constant 0 : index
    %c0_10 = arith.constant 0 : index
    %26 = vector.load %arg3[%c1, %c0_9, %c0_10] : memref<4x32x104xf32, #tpu.memory_space<vmem>>, vector<1x32x104xf32>
    %27 = vector.shape_cast %26 : vector<1x32x104xf32> to vector<32x104xf32>
    %cst_11 = arith.constant dense<0.000000e+00> : vector<32x128xf32>
    %28 = tpu.matmul %27, %25, %cst_11 {dimension_numbers = #tpu.dot_dimension_numbers<[1], [0], [0], [1], [0, 0, 1, 1], [], []>} : vector<32x104xf32>, vector<104x128xf32>, vector<32x128xf32> -> vector<32x128xf32>
    %29 = arith.addf %16, %28 : vector<32x128xf32>
    %30 = vector.extract_strided_slice %0 {offsets = [2, 0], sizes = [1, 128], strides = [1, 1]} : vector<4x128xi32> to vector<1x128xi32>
    %31 = vector.broadcast %2 : vector<104x1xi32> to vector<104x128xi32>
    %32 = vector.broadcast %30 : vector<1x128xi32> to vector<104x128xi32>
    %33 = arith.cmpi eq, %31, %32 : vector<104x128xi32>
    %34 = vector.extract_strided_slice %1 {offsets = [2, 0], sizes = [1, 128], strides = [1, 1]} : vector<4x128xf32> to vector<1x128xf32>
    %cst_12 = arith.constant 0.000000e+00 : f32
    %35 = vector.shape_cast %34 : vector<1x128xf32> to vector<1x128xf32>
    %36 = vector.broadcast %35 : vector<1x128xf32> to vector<104x128xf32>
    %37 = vector.broadcast %cst_12 : f32 to vector<104x128xf32>
    %38 = arith.select %33, %36, %37 : vector<104x128xi1>, vector<104x128xf32>
    %c2 = arith.constant 2 : index
    %c0_13 = arith.constant 0 : index
    %c0_14 = arith.constant 0 : index
    %39 = vector.load %arg3[%c2, %c0_13, %c0_14] : memref<4x32x104xf32, #tpu.memory_space<vmem>>, vector<1x32x104xf32>
    %40 = vector.shape_cast %39 : vector<1x32x104xf32> to vector<32x104xf32>
    %cst_15 = arith.constant dense<0.000000e+00> : vector<32x128xf32>
    %41 = tpu.matmul %40, %38, %cst_15 {dimension_numbers = #tpu.dot_dimension_numbers<[1], [0], [0], [1], [0, 0, 1, 1], [], []>} : vector<32x104xf32>, vector<104x128xf32>, vector<32x128xf32> -> vector<32x128xf32>
    %42 = arith.addf %29, %41 : vector<32x128xf32>
    %43 = vector.extract_strided_slice %0 {offsets = [3, 0], sizes = [1, 128], strides = [1, 1]} : vector<4x128xi32> to vector<1x128xi32>
    %44 = vector.broadcast %2 : vector<104x1xi32> to vector<104x128xi32>
    %45 = vector.broadcast %43 : vector<1x128xi32> to vector<104x128xi32>
    %46 = arith.cmpi eq, %44, %45 : vector<104x128xi32>
    %47 = vector.extract_strided_slice %1 {offsets = [3, 0], sizes = [1, 128], strides = [1, 1]} : vector<4x128xf32> to vector<1x128xf32>
    %cst_16 = arith.constant 0.000000e+00 : f32
    %48 = vector.shape_cast %47 : vector<1x128xf32> to vector<1x128xf32>
    %49 = vector.broadcast %48 : vector<1x128xf32> to vector<104x128xf32>
    %50 = vector.broadcast %cst_16 : f32 to vector<104x128xf32>
    %51 = arith.select %46, %49, %50 : vector<104x128xi1>, vector<104x128xf32>
    %c3 = arith.constant 3 : index
    %c0_17 = arith.constant 0 : index
    %c0_18 = arith.constant 0 : index
    %52 = vector.load %arg3[%c3, %c0_17, %c0_18] : memref<4x32x104xf32, #tpu.memory_space<vmem>>, vector<1x32x104xf32>
    %53 = vector.shape_cast %52 : vector<1x32x104xf32> to vector<32x104xf32>
    %cst_19 = arith.constant dense<0.000000e+00> : vector<32x128xf32>
    %54 = tpu.matmul %53, %51, %cst_19 {dimension_numbers = #tpu.dot_dimension_numbers<[1], [0], [0], [1], [0, 0, 1, 1], [], []>} : vector<32x104xf32>, vector<104x128xf32>, vector<32x128xf32> -> vector<32x128xf32>
    %55 = arith.addf %42, %54 : vector<32x128xf32>
    %c0_20 = arith.constant 0 : index
    %c0_21 = arith.constant 0 : index
    %56 = vector.load %arg4[%c0_20, %c0_21] : memref<32x1xf32, #tpu.memory_space<vmem>>, vector<32x1xf32>
    %57 = vector.broadcast %56 : vector<32x1xf32> to vector<32x128xf32>
    %58 = arith.addf %55, %57 : vector<32x128xf32>
    %cst_22 = arith.constant 0.000000e+00 : f32
    %59 = vector.broadcast %cst_22 : f32 to vector<32x128xf32>
    %60 = arith.maximumf %58, %59 : vector<32x128xf32>
    %c0_23 = arith.constant 0 : index
    %c0_24 = arith.constant 0 : index
    %c0_25 = arith.constant 0 : index
    %61 = vector.load %arg5[%c0_23, %c0_24, %c0_25] : memref<1x32x32xf32, #tpu.memory_space<vmem>>, vector<1x32x32xf32>
    %62 = vector.shape_cast %61 : vector<1x32x32xf32> to vector<32x32xf32>
    %cst_26 = arith.constant dense<0.000000e+00> : vector<32x128xf32>
    %63 = tpu.matmul %62, %60, %cst_26 {dimension_numbers = #tpu.dot_dimension_numbers<[1], [0], [0], [1], [0, 0, 1, 1], [], []>} : vector<32x32xf32>, vector<32x128xf32>, vector<32x128xf32> -> vector<32x128xf32>
    %c0_27 = arith.constant 0 : index
    %c0_28 = arith.constant 0 : index
    %c0_29 = arith.constant 0 : index
    %64 = vector.load %arg6[%c0_27, %c0_28, %c0_29] : memref<1x32x1xf32, #tpu.memory_space<vmem>>, vector<1x32x1xf32>
    %65 = vector.shape_cast %64 : vector<1x32x1xf32> to vector<32x1xf32>
    %66 = vector.broadcast %65 : vector<32x1xf32> to vector<32x128xf32>
    %67 = arith.addf %63, %66 : vector<32x128xf32>
    %cst_30 = arith.constant 0.000000e+00 : f32
    %68 = vector.broadcast %cst_30 : f32 to vector<32x128xf32>
    %69 = arith.maximumf %67, %68 : vector<32x128xf32>
    %c0_31 = arith.constant 0 : index
    %c0_32 = arith.constant 0 : index
    %70 = vector.load %arg7[%c0_31, %c0_32] : memref<1x32xf32, #tpu.memory_space<vmem>>, vector<1x32xf32>
    %cst_33 = arith.constant dense<0.000000e+00> : vector<1x128xf32>
    %71 = tpu.matmul %70, %69, %cst_33 {dimension_numbers = #tpu.dot_dimension_numbers<[1], [0], [0], [1], [0, 0, 1, 1], [], []>} : vector<1x32xf32>, vector<32x128xf32>, vector<1x128xf32> -> vector<1x128xf32>
    %c0_34 = arith.constant 0 : index
    %72 = memref.load %arg8[%c0_34] : memref<1xf32, #tpu.memory_space<smem>>
    %73 = vector.broadcast %72 : f32 to vector<1x128xf32>
    %74 = arith.addf %71, %73 : vector<1x128xf32>
    %c0_35 = arith.constant 0 : index
    %c0_36 = arith.constant 0 : index
    %75 = vector.load %arg9[%c0_35, %c0_36] : memref<1x128xf32, #tpu.memory_space<vmem>>, vector<1x128xf32>
    tpu.vector_store %arg9[%c0_35, %c0_36], %74 {strides = array<i32>} : memref<1x128xf32, #tpu.memory_space<vmem>>, vector<1x128xf32>,
    return
  }
  func.func @transform_0(%arg0: i32) -> (i32, i32) {
    %c0_i32 = arith.constant 0 : i32
    %c0_i32_0 = arith.constant 0 : i32
    return %c0_i32, %arg0 : i32, i32
  }
  func.func @transform_1(%arg0: i32) -> (i32, i32) {
    %c0_i32 = arith.constant 0 : i32
    %c0_i32_0 = arith.constant 0 : i32
    return %c0_i32, %arg0 : i32, i32
  }
  func.func @transform_2(%arg0: i32) -> (i32, i32, i32) {
    %c0_i32 = arith.constant 0 : i32
    %c0_i32_0 = arith.constant 0 : i32
    %c0_i32_1 = arith.constant 0 : i32
    %c0_i32_2 = arith.constant 0 : i32
    return %c0_i32, %c0_i32_0, %c0_i32_1 : i32, i32, i32
  }
  func.func @transform_3(%arg0: i32) -> (i32, i32) {
    %c0_i32 = arith.constant 0 : i32
    %c0_i32_0 = arith.constant 0 : i32
    %c0_i32_1 = arith.constant 0 : i32
    return %c0_i32, %c0_i32_0 : i32, i32
  }
  func.func @transform_4(%arg0: i32) -> (i32, i32, i32) {
    %c0_i32 = arith.constant 0 : i32
    %c0_i32_0 = arith.constant 0 : i32
    %c0_i32_1 = arith.constant 0 : i32
    %c0_i32_2 = arith.constant 0 : i32
    return %c0_i32, %c0_i32_0, %c0_i32_1 : i32, i32, i32
  }
  func.func @transform_5(%arg0: i32) -> (i32, i32, i32) {
    %c0_i32 = arith.constant 0 : i32
    %c0_i32_0 = arith.constant 0 : i32
    %c0_i32_1 = arith.constant 0 : i32
    %c0_i32_2 = arith.constant 0 : i32
    return %c0_i32, %c0_i32_0, %c0_i32_1 : i32, i32, i32
  }
  func.func @transform_6(%arg0: i32) -> (i32, i32) {
    %c0_i32 = arith.constant 0 : i32
    %c0_i32_0 = arith.constant 0 : i32
    %c0_i32_1 = arith.constant 0 : i32
    return %c0_i32, %c0_i32_0 : i32, i32
  }
  func.func @transform_7(%arg0: i32) -> i32 {
    %c0_i32 = arith.constant 0 : i32
    %c0_i32_0 = arith.constant 0 : i32
    return %c0_i32 : i32
  }
  func.func @transform_8(%arg0: i32) -> (i32, i32) {
    %c0_i32 = arith.constant 0 : i32
    %c0_i32_0 = arith.constant 0 : i32
    return %c0_i32, %arg0 : i32, i32
  }
}

</mosaic_0001>

<llo_original>
// kernel: tpu_custom_call.1
$region0: #{tpu_custom_call.1}
  #allocation0 [shape = 'u32[]', space=smem, size = 0x4, offset = 0x4, fixed_abs, tag = 'smem constant byte address 0x4 - core index']
  #allocation1 [shape = 'u32[144,128]{1,0:T(1,128)}', space=vmem, size = 0x12000, scoped, tag = 'internal scratch']
  #allocation2 [shape = 'f32[1]{0:T(128)S(6)}', space=smem, size = 0x200, scoped, tag = 'scoped memory for tpu_custom_call.1']
  %s0 = inlined_call_operand.vmem [shape: s32[4,128], index: 0, kind: input, shape index: {}]
  %s1 = inlined_call_operand.vmem [shape: f32[4,128], index: 1, kind: input, shape index: {}]
  %s2 = inlined_call_operand.hbm [shape: f32[4,32,104], index: 2, kind: input, shape index: {}]
  %s3 = inlined_call_operand.vmem [shape: f32[32,1], index: 3, kind: input, shape index: {}]
  %s4 = inlined_call_operand.vmem [shape: f32[1,32,32], index: 4, kind: input, shape index: {}]
  %s5 = inlined_call_operand.vmem [shape: f32[1,32,1], index: 5, kind: input, shape index: {}]
  %s6 = inlined_call_operand.vmem [shape: f32[1,32], index: 6, kind: input, shape index: {}]
  %s7 = inlined_call_operand.<no memory space> [shape: f32[1], index: 7, kind: input, shape index: {}]
  %s8 = inlined_call_operand.hbm [shape: f32[1,128], index: 8, kind: output, shape index: {}]
  %s9 = sld [smem:[#allocation0]]
  $region46: #{tpu_custom_call.1} parent=0
    _
  %s11 = ssub.s32 1, %s9
  %s12 = scalar_select 0, %s11, %s9
  %13 = sst [smem:[#allocation2]] %s7
  $region1: #{tpu_custom_call.1} parent=0
    #allocation3 [shape = 'u8[65536]{0}', space=vmem, size = 0x10000, scoped, tag = 'input window, operand 2, single buffered']
    #allocation4 [shape = 's32[1]{0}', space=sflag, size = 0x4, scoped, tag = 'scoped memory for tpu_custom_call.1']
    #allocation5 [shape = 's32[1]{0}', space=sflag, size = 0x4, scoped, tag = 'scoped memory for tpu_custom_call.1']
    #allocation6 [shape = 'u8[512]{0}', space=vmem, size = 0x400, scoped, tag = 'output window, operand 0, single buffered']
    %14 = vsyncpa [#allocation4], 0
    %15 = vsyncpa [#allocation5], 0
    // Predicated region
    $region2: #{tpu_custom_call.1} parent=1 // pred_check
      _
    $region3: #{tpu_custom_call.1} parent=1 // pred_check_branch
      %17 = sbr.rel (0) target = $region5
    $region4: #{tpu_custom_call.1} parent=1 // pred_region
      _
    $region5: #{tpu_custom_call.1} parent=1 // pred_fallthru
      _
    // Predicated region
    $region6: #{tpu_custom_call.1} parent=1 // pred_check
      _
    $region7: #{tpu_custom_call.1} parent=1 // pred_check_branch
      %19 = sbr.rel (0) target = $region9
    $region8: #{tpu_custom_call.1} parent=1 // pred_region
      _
    $region9: #{tpu_custom_call.1} parent=1 // pred_fallthru
      _
    // Predicated region
    $region10: #{tpu_custom_call.1} parent=1 // pred_check
      _
    $region11: #{tpu_custom_call.1} parent=1 // pred_check_branch
      %21 = sbr.rel (0) target = $region13
    $region12: #{tpu_custom_call.1} parent=1 // pred_region
      %s23 = ssub.s32 2048, 2048
      %24 = vsyncadd [#allocation4], %s23
      %s25 = sshll.u32 [#allocation3], 4
      %s26 = int_to_ptr.vmem [resolvable:$true] %s25
      %31 = dma.hbm_to_vmem [thread:$0]  %s2, 2048, %s26, [#allocation4], 128, 128, 8
    $region13: #{tpu_custom_call.1} parent=1 // pred_fallthru
      _
    // Predicated region
    $region14: #{tpu_custom_call.1} parent=1 // pred_check
      _
    $region15: #{tpu_custom_call.1} parent=1 // pred_check_branch
      %33 = sbr.rel (0) target = $region17
    $region16: #{tpu_custom_call.1} parent=1 // pred_region
      _
    $region17: #{tpu_custom_call.1} parent=1 // pred_fallthru
      _
    // Predicated region
    $region18: #{tpu_custom_call.1} parent=1 // pred_check
      _
    $region19: #{tpu_custom_call.1} parent=1 // pred_check_branch
      %35 = sbr.rel (0) target = $region21
    $region20: #{tpu_custom_call.1} parent=1 // pred_region
      _
    $region21: #{tpu_custom_call.1} parent=1 // pred_fallthru
      _
    // Predicated region
    $region22: #{tpu_custom_call.1} parent=1 // pred_check
      _
    $region23: #{tpu_custom_call.1} parent=1 // pred_check_branch
      %37 = sbr.rel (0) target = $region25
    $region24: #{tpu_custom_call.1} parent=1 // pred_region
      _
    $region25: #{tpu_custom_call.1} parent=1 // pred_fallthru
      _
    // Predicated region
    $region26: #{tpu_custom_call.1} parent=1 // pred_check
      _
    $region27: #{tpu_custom_call.1} parent=1 // pred_check_branch
      %39 = sbr.rel (0) target = $region29
    $region28: #{tpu_custom_call.1} parent=1 // pred_region
      _
    $region29: #{tpu_custom_call.1} parent=1 // pred_fallthru
      _
    // Predicated region
    $region30: #{tpu_custom_call.1} parent=1 // pred_check
      _
    $region31: #{tpu_custom_call.1} parent=1 // pred_check_branch
      %41 = sbr.rel (0) target = $region33
    $region32: #{tpu_custom_call.1} parent=1 // pred_region
      _
    $region33: #{tpu_custom_call.1} parent=1 // pred_fallthru
      _
    // Predicated region
    $region34: #{tpu_custom_call.1} parent=1 // pred_check
      _
    $region35: #{tpu_custom_call.1} parent=1 // pred_check_branch
      %43 = sbr.rel (0) target = $region37
    $region36: #{tpu_custom_call.1} parent=1 // pred_region
      %44 = dma.done [#allocation4], 2048
    $region37: #{tpu_custom_call.1} parent=1 // pred_fallthru
      _
    %v45 = vld [vmem:[%s0] sm:$0xf]
    %v46 = vld [vmem:[%s1] sm:$0xf]
    %v47 = vlaneseq
    %v48 = vshrl.u32 %v47, 7
    %v49 = vadd.s32 %v48, 8
    %v50 = vadd.s32 %v48, 16
    %v51 = vadd.s32 %v48, 24
    %v52 = vadd.s32 %v48, 32
    %v53 = vadd.s32 %v48, 40
    %v54 = vadd.s32 %v48, 48
    %v55 = vadd.s32 %v48, 56
    %v56 = vadd.s32 %v48, 64
    %v57 = vadd.s32 %v48, 72
    %v58 = vadd.s32 %v48, 80
    %v59 = vadd.s32 %v48, 88
    %v60 = vadd.s32 %v48, 96
    %v61 = vlaneseq
    %v62 = vshrl.u32 %v61, 7
    %v63 = vsub.s32 0, %v62
    %v64 = vrot.slane %v45, %v63
    %vm65 = vcmp.eq.s32.totalorder %v48, %v64
    %vm66 = vcmp.eq.s32.totalorder %v49, %v64
    %vm67 = vcmp.eq.s32.totalorder %v50, %v64
    %vm68 = vcmp.eq.s32.totalorder %v51, %v64
    %vm69 = vcmp.eq.s32.totalorder %v52, %v64
    %vm70 = vcmp.eq.s32.totalorder %v53, %v64
    %vm71 = vcmp.eq.s32.totalorder %v54, %v64
    %vm72 = vcmp.eq.s32.totalorder %v55, %v64
    %vm73 = vcmp.eq.s32.totalorder %v56, %v64
    %vm74 = vcmp.eq.s32.totalorder %v57, %v64
    %vm75 = vcmp.eq.s32.totalorder %v58, %v64
    %vm76 = vcmp.eq.s32.totalorder %v59, %v64
    %vm77 = vcmp.eq.s32.totalorder %v60, %v64
    %v78 = vlaneseq
    %v79 = vshrl.u32 %v78, 7
    %v80 = vsub.s32 0, %v79
    %v81 = vrot.slane %v46, %v80
    %v82 = vsel %vm65, %v81, 0.0
    %v83 = vsel %vm66, %v81, 0.0
    %v84 = vsel %vm67, %v81, 0.0
    %v85 = vsel %vm68, %v81, 0.0
    %v86 = vsel %vm69, %v81, 0.0
    %v87 = vsel %vm70, %v81, 0.0
    %v88 = vsel %vm71, %v81, 0.0
    %v89 = vsel %vm72, %v81, 0.0
    %v90 = vsel %vm73, %v81, 0.0
    %v91 = vsel %vm74, %v81, 0.0
    %v92 = vsel %vm75, %v81, 0.0
    %v93 = vsel %vm76, %v81, 0.0
    %v94 = vsel %vm77, %v81, 0.0
    %v95 = vld [vmem:[#allocation3] sm:$0xff]
    %v96 = vld [vmem:[#allocation3 + $0x8] sm:$0xff]
    %v97 = vld [vmem:[#allocation3 + $0x10] sm:$0xff]
    %v98 = vld [vmem:[#allocation3 + $0x18] sm:$0xff]
    %v99 = vlaneseq
    %v100 = vshrl.u32 %v99, 7
    %v101 = vsub.s32 1, %v100
    %v102 = vrot.slane %v45, %v101
    %vm103 = vcmp.eq.s32.totalorder %v48, %v102
    %vm104 = vcmp.eq.s32.totalorder %v49, %v102
    %vm105 = vcmp.eq.s32.totalorder %v50, %v102
    %vm106 = vcmp.eq.s32.totalorder %v51, %v102
    %vm107 = vcmp.eq.s32.totalorder %v52, %v102
    %vm108 = vcmp.eq.s32.totalorder %v53, %v102
    %vm109 = vcmp.eq.s32.totalorder %v54, %v102
    %vm110 = vcmp.eq.s32.totalorder %v55, %v102
    %vm111 = vcmp.eq.s32.totalorder %v56, %v102
    %vm112 = vcmp.eq.s32.totalorder %v57, %v102
    %vm113 = vcmp.eq.s32.totalorder %v58, %v102
    %vm114 = vcmp.eq.s32.totalorder %v59, %v102
    %vm115 = vcmp.eq.s32.totalorder %v60, %v102
    %v116 = vlaneseq
    %v117 = vshrl.u32 %v116, 7
    %v118 = vsub.s32 1, %v117
    %v119 = vrot.slane %v46, %v118
    %v120 = vsel %vm103, %v119, 0.0
    %v121 = vsel %vm104, %v119, 0.0
    %v122 = vsel %vm105, %v119, 0.0
    %v123 = vsel %vm106, %v119, 0.0
    %v124 = vsel %vm107, %v119, 0.0
    %v125 = vsel %vm108, %v119, 0.0
    %v126 = vsel %vm109, %v119, 0.0
    %v127 = vsel %vm110, %v119, 0.0
    %v128 = vsel %vm111, %v119, 0.0
    %v129 = vsel %vm112, %v119, 0.0
    %v130 = vsel %vm113, %v119, 0.0
    %v131 = vsel %vm114, %v119, 0.0
    %v132 = vsel %vm115, %v119, 0.0
    %s133 = scalar_lea.vmem [#allocation3], 32
    %v134 = vld [vmem:[%s133] sm:$0xff]
    %v135 = vld [vmem:[%s133 + $0x8] sm:$0xff]
    %v136 = vld [vmem:[%s133 + $0x10] sm:$0xff]
    %v137 = vld [vmem:[%s133 + $0x18] sm:$0xff]
    %vm138 = vcmask 850944
    %v140 = vsel %vm138, %v134, 0
    %v143 = vsel %vm138, %v135, 0
    %v146 = vsel %vm138, %v136, 0
    %v149 = vsel %vm138, %v137, 0
    %151 = vmatprep.subr.mxu0 0.0
    %152 = vmatpush1.msra.mxu0 0.0
    %153 = vmatprep.subr.mxu0 0.0
    %154 = vmatpush1.msra.mxu0 0.0
    %155 = vmatprep.subr.mxu0 0.0
    %156 = vmatpush1.msra.mxu0 0.0
    %157 = vmatprep.subr.mxu0 0.0
    %158 = vmatpush1.msra.mxu0 %v132
    %159 = vmatprep.subr.mxu0 0.0
    %160 = vmatpush1.msra.mxu0 %v131
    %161 = vmatprep.subr.mxu0 0.0
    %162 = vmatpush1.msra.mxu0 %v130
    %163 = vmatprep.subr.mxu0 0.0
    %164 = vmatpush1.msra.mxu0 %v129
    %165 = vmatprep.subr.mxu0 0.0
    %166 = vmatpush1.msra.mxu0 %v128
    %167 = vmatprep.subr.mxu0 0.0
    %168 = vmatpush1.msra.mxu0 %v127
    %169 = vmatprep.subr.mxu0 0.0
    %170 = vmatpush1.msra.mxu0 %v126
    %171 = vmatprep.subr.mxu0 0.0
    %172 = vmatpush1.msra.mxu0 %v125
    %173 = vmatprep.subr.mxu0 0.0
    %174 = vmatpush1.msra.mxu0 %v124
    %175 = vmatprep.subr.mxu0 0.0
    %176 = vmatpush1.msra.mxu0 %v123
    %177 = vmatprep.subr.mxu0 0.0
    %178 = vmatpush1.msra.mxu0 %v122
    %179 = vmatprep.subr.mxu0 0.0
    %180 = vmatpush1.msra.mxu0 %v121
    %181 = vmatprep.subr.mxu0 0.0
    %182 = vmatpush1.msra.mxu0 %v120
    %183 = vmatprep.subr.mxu0 0.0
    %184 = vmatpush2.msra.mxu0 0.0
    %185 = vmatprep.subr.mxu0 0.0
    %186 = vmatpush2.msra.mxu0 0.0
    %187 = vmatprep.subr.mxu0 0.0
    %188 = vmatpush2.msra.mxu0 0.0
    %189 = vmatprep.subr.mxu0 0.0
    %190 = vmatpush2.msra.mxu0 0.0
    %191 = vmatprep.subr.mxu0 0.0
    %192 = vmatpush2.msra.mxu0 0.0
    %193 = vmatprep.subr.mxu0 0.0
    %194 = vmatpush2.msra.mxu0 0.0
    %195 = vmatprep.subr.mxu0 0.0
    %196 = vmatpush2.msra.mxu0 0.0
    %197 = vmatprep.subr.mxu0 0.0
    %198 = vmatpush2.msra.mxu0 0.0
    %199 = vmatprep.subr.mxu0 0.0
    %200 = vmatpush2.msra.mxu0 0.0
    %201 = vmatprep.subr.mxu0 0.0
    %202 = vmatpush2.msra.mxu0 0.0
    %203 = vmatprep.subr.mxu0 0.0
    %204 = vmatpush2.msra.mxu0 0.0
    %205 = vmatprep.subr.mxu0 0.0
    %206 = vmatpush2.msra.mxu0 0.0
    %207 = vmatprep.subr.mxu0 0.0
    %208 = vmatpush2.msra.mxu0 0.0
    %209 = vmatprep.subr.mxu0 0.0
    %210 = vmatpush2.msra.mxu0 0.0
    %211 = vmatprep.subr.mxu0 0.0
    %212 = vmatpush2.msra.mxu0 0.0
    %213 = vmatprep.subr.mxu0 0.0
    %214 = vmatpush2.msra.mxu0 0.0
    %215 = vmatprep.mubr.f32.mxu0 0.0
    %216 = vmatmul.mubr.f32.gmra.mxu0 %v140
    %v217 = vpop.f32.mrf.mxu0
    %v218 = vadd.f32 0.0, %v217
    %v219 = vpop.f32.mrf.mxu0
    %220 = vmatprep.mubr.f32.mxu0 0.0
    %221 = vmatmul.mubr.f32.gmra.mxu0 %v143
    %v222 = vpop.f32.mrf.mxu0
    %v223 = vadd.f32 0.0, %v222
    %v224 = vpop.f32.mrf.mxu0
    %225 = vmatprep.mubr.f32.mxu0 0.0
    %226 = vmatmul.mubr.f32.gmra.mxu0 %v146
    %v227 = vpop.f32.mrf.mxu0
    %v228 = vadd.f32 0.0, %v227
    %v229 = vpop.f32.mrf.mxu0
    %230 = vmatprep.mubr.f32.mxu0 0.0
    %231 = vmatmul.mubr.f32.gmra.mxu0 %v149
    %v232 = vpop.f32.mrf.mxu0
    %v233 = vadd.f32 0.0, %v232
    %v234 = vpop.f32.mrf.mxu0
    %235 = vdwg.mxu0
    %v237 = vsel %vm138, %v95, 0
    %v240 = vsel %vm138, %v96, 0
    %v243 = vsel %vm138, %v97, 0
    %v246 = vsel %vm138, %v98, 0
    %248 = vmatprep.subr.mxu0 0.0
    %249 = vmatpush1.msra.mxu0 0.0
    %250 = vmatprep.subr.mxu0 0.0
    %251 = vmatpush1.msra.mxu0 0.0
    %252 = vmatprep.subr.mxu0 0.0
    %253 = vmatpush1.msra.mxu0 0.0
    %254 = vmatprep.subr.mxu0 0.0
    %255 = vmatpush1.msra.mxu0 %v94
    %256 = vmatprep.subr.mxu0 0.0
    %257 = vmatpush1.msra.mxu0 %v93
    %258 = vmatprep.subr.mxu0 0.0
    %259 = vmatpush1.msra.mxu0 %v92
    %260 = vmatprep.subr.mxu0 0.0
    %261 = vmatpush1.msra.mxu0 %v91
    %262 = vmatprep.subr.mxu0 0.0
    %263 = vmatpush1.msra.mxu0 %v90
    %264 = vmatprep.subr.mxu0 0.0
    %265 = vmatpush1.msra.mxu0 %v89
    %266 = vmatprep.subr.mxu0 0.0
    %267 = vmatpush1.msra.mxu0 %v88
    %268 = vmatprep.subr.mxu0 0.0
    %269 = vmatpush1.msra.mxu0 %v87
    %270 = vmatprep.subr.mxu0 0.0
    %271 = vmatpush1.msra.mxu0 %v86
    %272 = vmatprep.subr.mxu0 0.0
    %273 = vmatpush1.msra.mxu0 %v85
    %274 = vmatprep.subr.mxu0 0.0
    %275 = vmatpush1.msra.mxu0 %v84
    %276 = vmatprep.subr.mxu0 0.0
    %277 = vmatpush1.msra.mxu0 %v83
    %278 = vmatprep.subr.mxu0 0.0
    %279 = vmatpush1.msra.mxu0 %v82
    %280 = vmatprep.subr.mxu0 0.0
    %281 = vmatpush2.msra.mxu0 0.0
    %282 = vmatprep.subr.mxu0 0.0
    %283 = vmatpush2.msra.mxu0 0.0
    %284 = vmatprep.subr.mxu0 0.0
    %285 = vmatpush2.msra.mxu0 0.0
    %286 = vmatprep.subr.mxu0 0.0
    %287 = vmatpush2.msra.mxu0 0.0
    %288 = vmatprep.subr.mxu0 0.0
    %289 = vmatpush2.msra.mxu0 0.0
    %290 = vmatprep.subr.mxu0 0.0
    %291 = vmatpush2.msra.mxu0 0.0
    %292 = vmatprep.subr.mxu0 0.0
    %293 = vmatpush2.msra.mxu0 0.0
    %294 = vmatprep.subr.mxu0 0.0
    %295 = vmatpush2.msra.mxu0 0.0
    %296 = vmatprep.subr.mxu0 0.0
    %297 = vmatpush2.msra.mxu0 0.0
    %298 = vmatprep.subr.mxu0 0.0
    %299 = vmatpush2.msra.mxu0 0.0
    %300 = vmatprep.subr.mxu0 0.0
    %301 = vmatpush2.msra.mxu0 0.0
    %302 = vmatprep.subr.mxu0 0.0
    %303 = vmatpush2.msra.mxu0 0.0
    %304 = vmatprep.subr.mxu0 0.0
    %305 = vmatpush2.msra.mxu0 0.0
    %306 = vmatprep.subr.mxu0 0.0
    %307 = vmatpush2.msra.mxu0 0.0
    %308 = vmatprep.subr.mxu0 0.0
    %309 = vmatpush2.msra.mxu0 0.0
    %310 = vmatprep.subr.mxu0 0.0
    %311 = vmatpush2.msra.mxu0 0.0
    %312 = vmatprep.mubr.f32.mxu0 0.0
    %313 = vmatmul.mubr.f32.gmra.mxu0 %v237
    %v314 = vpop.f32.mrf.mxu0
    %v315 = vadd.f32 %v218, %v314
    %v316 = vpop.f32.mrf.mxu0
    %317 = vmatprep.mubr.f32.mxu0 0.0
    %318 = vmatmul.mubr.f32.gmra.mxu0 %v240
    %v319 = vpop.f32.mrf.mxu0
    %v320 = vadd.f32 %v223, %v319
    %v321 = vpop.f32.mrf.mxu0
    %322 = vmatprep.mubr.f32.mxu0 0.0
    %323 = vmatmul.mubr.f32.gmra.mxu0 %v243
    %v324 = vpop.f32.mrf.mxu0
    %v325 = vadd.f32 %v228, %v324
    %v326 = vpop.f32.mrf.mxu0
    %327 = vmatprep.mubr.f32.mxu0 0.0
    %328 = vmatmul.mubr.f32.gmra.mxu0 %v246
    %v329 = vpop.f32.mrf.mxu0
    %v330 = vadd.f32 %v233, %v329
    %v331 = vpop.f32.mrf.mxu0
    %332 = vdwg.mxu0
    %v333 = vlaneseq
    %v334 = vshrl.u32 %v333, 7
    %v335 = vsub.s32 2, %v334
    %v336 = vrot.slane %v45, %v335
    %vm337 = vcmp.eq.s32.totalorder %v48, %v336
    %vm338 = vcmp.eq.s32.totalorder %v49, %v336
    %vm339 = vcmp.eq.s32.totalorder %v50, %v336
    %vm340 = vcmp.eq.s32.totalorder %v51, %v336
    %vm341 = vcmp.eq.s32.totalorder %v52, %v336
    %vm342 = vcmp.eq.s32.totalorder %v53, %v336
    %vm343 = vcmp.eq.s32.totalorder %v54, %v336
    %vm344 = vcmp.eq.s32.totalorder %v55, %v336
    %vm345 = vcmp.eq.s32.totalorder %v56, %v336
    %vm346 = vcmp.eq.s32.totalorder %v57, %v336
    %vm347 = vcmp.eq.s32.totalorder %v58, %v336
    %vm348 = vcmp.eq.s32.totalorder %v59, %v336
    %vm349 = vcmp.eq.s32.totalorder %v60, %v336
    %v350 = vlaneseq
    %v351 = vshrl.u32 %v350, 7
    %v352 = vsub.s32 2, %v351
    %v353 = vrot.slane %v46, %v352
    %v354 = vsel %vm337, %v353, 0.0
    %v355 = vsel %vm338, %v353, 0.0
    %v356 = vsel %vm339, %v353, 0.0
    %v357 = vsel %vm340, %v353, 0.0
    %v358 = vsel %vm341, %v353, 0.0
    %v359 = vsel %vm342, %v353, 0.0
    %v360 = vsel %vm343, %v353, 0.0
    %v361 = vsel %vm344, %v353, 0.0
    %v362 = vsel %vm345, %v353, 0.0
    %v363 = vsel %vm346, %v353, 0.0
    %v364 = vsel %vm347, %v353, 0.0
    %v365 = vsel %vm348, %v353, 0.0
    %v366 = vsel %vm349, %v353, 0.0
    %s367 = scalar_lea.vmem [#allocation3], 64
    %v368 = vld [vmem:[%s367] sm:$0xff]
    %v369 = vld [vmem:[%s367 + $0x8] sm:$0xff]
    %v370 = vld [vmem:[%s367 + $0x10] sm:$0xff]
    %v371 = vld [vmem:[%s367 + $0x18] sm:$0xff]
    %v373 = vsel %vm138, %v368, 0
    %v376 = vsel %vm138, %v369, 0
    %v379 = vsel %vm138, %v370, 0
    %v382 = vsel %vm138, %v371, 0
    %384 = vmatprep.subr.mxu0 0.0
    %385 = vmatpush1.msra.mxu0 0.0
    %386 = vmatprep.subr.mxu0 0.0
    %387 = vmatpush1.msra.mxu0 0.0
    %388 = vmatprep.subr.mxu0 0.0
    %389 = vmatpush1.msra.mxu0 0.0
    %390 = vmatprep.subr.mxu0 0.0
    %391 = vmatpush1.msra.mxu0 %v366
    %392 = vmatprep.subr.mxu0 0.0
    %393 = vmatpush1.msra.mxu0 %v365
    %394 = vmatprep.subr.mxu0 0.0
    %395 = vmatpush1.msra.mxu0 %v364
    %396 = vmatprep.subr.mxu0 0.0
    %397 = vmatpush1.msra.mxu0 %v363
    %398 = vmatprep.subr.mxu0 0.0
    %399 = vmatpush1.msra.mxu0 %v362
    %400 = vmatprep.subr.mxu0 0.0
    %401 = vmatpush1.msra.mxu0 %v361
    %402 = vmatprep.subr.mxu0 0.0
    %403 = vmatpush1.msra.mxu0 %v360
    %404 = vmatprep.subr.mxu0 0.0
    %405 = vmatpush1.msra.mxu0 %v359
    %406 = vmatprep.subr.mxu0 0.0
    %407 = vmatpush1.msra.mxu0 %v358
    %408 = vmatprep.subr.mxu0 0.0
    %409 = vmatpush1.msra.mxu0 %v357
    %410 = vmatprep.subr.mxu0 0.0
    %411 = vmatpush1.msra.mxu0 %v356
    %412 = vmatprep.subr.mxu0 0.0
    %413 = vmatpush1.msra.mxu0 %v355
    %414 = vmatprep.subr.mxu0 0.0
    %415 = vmatpush1.msra.mxu0 %v354
    %416 = vmatprep.subr.mxu0 0.0
    %417 = vmatpush2.msra.mxu0 0.0
    %418 = vmatprep.subr.mxu0 0.0
    %419 = vmatpush2.msra.mxu0 0.0
    %420 = vmatprep.subr.mxu0 0.0
    %421 = vmatpush2.msra.mxu0 0.0
    %422 = vmatprep.subr.mxu0 0.0
    %423 = vmatpush2.msra.mxu0 0.0
    %424 = vmatprep.subr.mxu0 0.0
    %425 = vmatpush2.msra.mxu0 0.0
    %426 = vmatprep.subr.mxu0 0.0
    %427 = vmatpush2.msra.mxu0 0.0
    %428 = vmatprep.subr.mxu0 0.0
    %429 = vmatpush2.msra.mxu0 0.0
    %430 = vmatprep.subr.mxu0 0.0
    %431 = vmatpush2.msra.mxu0 0.0
    %432 = vmatprep.subr.mxu0 0.0
    %433 = vmatpush2.msra.mxu0 0.0
    %434 = vmatprep.subr.mxu0 0.0
    %435 = vmatpush2.msra.mxu0 0.0
    %436 = vmatprep.subr.mxu0 0.0
    %437 = vmatpush2.msra.mxu0 0.0
    %438 = vmatprep.subr.mxu0 0.0
    %439 = vmatpush2.msra.mxu0 0.0
    %440 = vmatprep.subr.mxu0 0.0
    %441 = vmatpush2.msra.mxu0 0.0
    %442 = vmatprep.subr.mxu0 0.0
    %443 = vmatpush2.msra.mxu0 0.0
    %444 = vmatprep.subr.mxu0 0.0
    %445 = vmatpush2.msra.mxu0 0.0
    %446 = vmatprep.subr.mxu0 0.0
    %447 = vmatpush2.msra.mxu0 0.0
    %448 = vmatprep.mubr.f32.mxu0 0.0
    %449 = vmatmul.mubr.f32.gmra.mxu0 %v373
    %v450 = vpop.f32.mrf.mxu0
    %v451 = vadd.f32 0.0, %v450
    %v452 = vpop.f32.mrf.mxu0
    %453 = vmatprep.mubr.f32.mxu0 0.0
    %454 = vmatmul.mubr.f32.gmra.mxu0 %v376
    %v455 = vpop.f32.mrf.mxu0
    %v456 = vadd.f32 0.0, %v455
    %v457 = vpop.f32.mrf.mxu0
    %458 = vmatprep.mubr.f32.mxu0 0.0
    %459 = vmatmul.mubr.f32.gmra.mxu0 %v379
    %v460 = vpop.f32.mrf.mxu0
    %v461 = vadd.f32 0.0, %v460
    %v462 = vpop.f32.mrf.mxu0
    %463 = vmatprep.mubr.f32.mxu0 0.0
    %464 = vmatmul.mubr.f32.gmra.mxu0 %v382
    %v465 = vpop.f32.mrf.mxu0
    %v466 = vadd.f32 0.0, %v465
    %v467 = vpop.f32.mrf.mxu0
    %468 = vdwg.mxu0
    %v469 = vadd.f32 %v315, %v451
    %v470 = vadd.f32 %v320, %v456
    %v471 = vadd.f32 %v325, %v461
    %v472 = vadd.f32 %v330, %v466
    %v473 = vlaneseq
    %v474 = vshrl.u32 %v473, 7
    %v475 = vsub.s32 3, %v474
    %v476 = vrot.slane %v45, %v475
    %vm477 = vcmp.eq.s32.totalorder %v48, %v476
    %vm478 = vcmp.eq.s32.totalorder %v49, %v476
    %vm479 = vcmp.eq.s32.totalorder %v50, %v476
    %vm480 = vcmp.eq.s32.totalorder %v51, %v476
    %vm481 = vcmp.eq.s32.totalorder %v52, %v476
    %vm482 = vcmp.eq.s32.totalorder %v53, %v476
    %vm483 = vcmp.eq.s32.totalorder %v54, %v476
    %vm484 = vcmp.eq.s32.totalorder %v55, %v476
    %vm485 = vcmp.eq.s32.totalorder %v56, %v476
    %vm486 = vcmp.eq.s32.totalorder %v57, %v476
    %vm487 = vcmp.eq.s32.totalorder %v58, %v476
    %vm488 = vcmp.eq.s32.totalorder %v59, %v476
    %vm489 = vcmp.eq.s32.totalorder %v60, %v476
    %v490 = vlaneseq
    %v491 = vshrl.u32 %v490, 7
    %v492 = vsub.s32 3, %v491
    %v493 = vrot.slane %v46, %v492
    %v494 = vsel %vm477, %v493, 0.0
    %v495 = vsel %vm478, %v493, 0.0
    %v496 = vsel %vm479, %v493, 0.0
    %v497 = vsel %vm480, %v493, 0.0
    %v498 = vsel %vm481, %v493, 0.0
    %v499 = vsel %vm482, %v493, 0.0
    %v500 = vsel %vm483, %v493, 0.0
    %v501 = vsel %vm484, %v493, 0.0
    %v502 = vsel %vm485, %v493, 0.0
    %v503 = vsel %vm486, %v493, 0.0
    %v504 = vsel %vm487, %v493, 0.0
    %v505 = vsel %vm488, %v493, 0.0
    %v506 = vsel %vm489, %v493, 0.0
    %s507 = scalar_lea.vmem [#allocation3], 96
    %v508 = vld [vmem:[%s507] sm:$0xff]
    %v509 = vld [vmem:[%s507 + $0x8] sm:$0xff]
    %v510 = vld [vmem:[%s507 + $0x10] sm:$0xff]
    %v511 = vld [vmem:[%s507 + $0x18] sm:$0xff]
    %v513 = vsel %vm138, %v508, 0
    %v516 = vsel %vm138, %v509, 0
    %v519 = vsel %vm138, %v510, 0
    %v522 = vsel %vm138, %v511, 0
    %524 = vmatprep.subr.mxu0 0.0
    %525 = vmatpush1.msra.mxu0 0.0
    %526 = vmatprep.subr.mxu0 0.0
    %527 = vmatpush1.msra.mxu0 0.0
    %528 = vmatprep.subr.mxu0 0.0
    %529 = vmatpush1.msra.mxu0 0.0
    %530 = vmatprep.subr.mxu0 0.0
    %531 = vmatpush1.msra.mxu0 %v506
    %532 = vmatprep.subr.mxu0 0.0
    %533 = vmatpush1.msra.mxu0 %v505
    %534 = vmatprep.subr.mxu0 0.0
    %535 = vmatpush1.msra.mxu0 %v504
    %536 = vmatprep.subr.mxu0 0.0
    %537 = vmatpush1.msra.mxu0 %v503
    %538 = vmatprep.subr.mxu0 0.0
    %539 = vmatpush1.msra.mxu0 %v502
    %540 = vmatprep.subr.mxu0 0.0
    %541 = vmatpush1.msra.mxu0 %v501
    %542 = vmatprep.subr.mxu0 0.0
    %543 = vmatpush1.msra.mxu0 %v500
    %544 = vmatprep.subr.mxu0 0.0
    %545 = vmatpush1.msra.mxu0 %v499
    %546 = vmatprep.subr.mxu0 0.0
    %547 = vmatpush1.msra.mxu0 %v498
    %548 = vmatprep.subr.mxu0 0.0
    %549 = vmatpush1.msra.mxu0 %v497
    %550 = vmatprep.subr.mxu0 0.0
    %551 = vmatpush1.msra.mxu0 %v496
    %552 = vmatprep.subr.mxu0 0.0
    %553 = vmatpush1.msra.mxu0 %v495
    %554 = vmatprep.subr.mxu0 0.0
    %555 = vmatpush1.msra.mxu0 %v494
    %556 = vmatprep.subr.mxu0 0.0
    %557 = vmatpush2.msra.mxu0 0.0
    %558 = vmatprep.subr.mxu0 0.0
    %559 = vmatpush2.msra.mxu0 0.0
    %560 = vmatprep.subr.mxu0 0.0
    %561 = vmatpush2.msra.mxu0 0.0
    %562 = vmatprep.subr.mxu0 0.0
    %563 = vmatpush2.msra.mxu0 0.0
    %564 = vmatprep.subr.mxu0 0.0
    %565 = vmatpush2.msra.mxu0 0.0
    %566 = vmatprep.subr.mxu0 0.0
    %567 = vmatpush2.msra.mxu0 0.0
    %568 = vmatprep.subr.mxu0 0.0
    %569 = vmatpush2.msra.mxu0 0.0
    %570 = vmatprep.subr.mxu0 0.0
    %571 = vmatpush2.msra.mxu0 0.0
    %572 = vmatprep.subr.mxu0 0.0
    %573 = vmatpush2.msra.mxu0 0.0
    %574 = vmatprep.subr.mxu0 0.0
    %575 = vmatpush2.msra.mxu0 0.0
    %576 = vmatprep.subr.mxu0 0.0
    %577 = vmatpush2.msra.mxu0 0.0
    %578 = vmatprep.subr.mxu0 0.0
    %579 = vmatpush2.msra.mxu0 0.0
    %580 = vmatprep.subr.mxu0 0.0
    %581 = vmatpush2.msra.mxu0 0.0
    %582 = vmatprep.subr.mxu0 0.0
    %583 = vmatpush2.msra.mxu0 0.0
    %584 = vmatprep.subr.mxu0 0.0
    %585 = vmatpush2.msra.mxu0 0.0
    %586 = vmatprep.subr.mxu0 0.0
    %587 = vmatpush2.msra.mxu0 0.0
    %588 = vmatprep.mubr.f32.mxu0 0.0
    %589 = vmatmul.mubr.f32.gmra.mxu0 %v513
    %v590 = vpop.f32.mrf.mxu0
    %v591 = vadd.f32 0.0, %v590
    %v592 = vpop.f32.mrf.mxu0
    %593 = vmatprep.mubr.f32.mxu0 0.0
    %594 = vmatmul.mubr.f32.gmra.mxu0 %v516
    %v595 = vpop.f32.mrf.mxu0
    %v596 = vadd.f32 0.0, %v595
    %v597 = vpop.f32.mrf.mxu0
    %598 = vmatprep.mubr.f32.mxu0 0.0
    %599 = vmatmul.mubr.f32.gmra.mxu0 %v519
    %v600 = vpop.f32.mrf.mxu0
    %v601 = vadd.f32 0.0, %v600
    %v602 = vpop.f32.mrf.mxu0
    %603 = vmatprep.mubr.f32.mxu0 0.0
    %604 = vmatmul.mubr.f32.gmra.mxu0 %v522
    %v605 = vpop.f32.mrf.mxu0
    %v606 = vadd.f32 0.0, %v605
    %v607 = vpop.f32.mrf.mxu0
    %608 = vdwg.mxu0
    %v609 = vadd.f32 %v469, %v591
    %v610 = vadd.f32 %v470, %v596
    %v611 = vadd.f32 %v471, %v601
    %v612 = vadd.f32 %v472, %v606
    %v613 = vld [vmem:[%s3] sm:$0xff]
    %v614 = vld [vmem:[%s3 + $0x8] sm:$0xff]
    %v615 = vld [vmem:[%s3 + $0x10] sm:$0xff]
    %v616 = vld [vmem:[%s3 + $0x18] sm:$0xff]
    %618 = vset.pattern.permute.xlu0 0
    %619 = vperm.xlu0 %618, %v613
    %v620 = vpop.permute.xlu0 %619
    %623 = vset.pattern.permute.xlu0 0
    %624 = vperm.xlu0 %623, %v614
    %v625 = vpop.permute.xlu0 %624
    %628 = vset.pattern.permute.xlu0 0
    %629 = vperm.xlu0 %628, %v615
    %v630 = vpop.permute.xlu0 %629
    %633 = vset.pattern.permute.xlu0 0
    %634 = vperm.xlu0 %633, %v616
    %v635 = vpop.permute.xlu0 %634
    %v637 = vadd.f32 %v609, %v620
    %v638 = vadd.f32 %v610, %v625
    %v639 = vadd.f32 %v611, %v630
    %v640 = vadd.f32 %v612, %v635
    %v641 = vmax.f32 %v637, 0.0
    %v642 = vmax.f32 %v638, 0.0
    %v643 = vmax.f32 %v639, 0.0
    %v644 = vmax.f32 %v640, 0.0
    %v645 = vld [vmem:[%s4] sm:$0xff]
    %v646 = vld [vmem:[%s4 + $0x8] sm:$0xff]
    %v647 = vld [vmem:[%s4 + $0x10] sm:$0xff]
    %v648 = vld [vmem:[%s4 + $0x18] sm:$0xff]
    %v649 = vld [vmem:[%s5] sm:$0xff]
    %v650 = vld [vmem:[%s5 + $0x8] sm:$0xff]
    %v651 = vld [vmem:[%s5 + $0x10] sm:$0xff]
    %v652 = vld [vmem:[%s5 + $0x18] sm:$0xff]
    %654 = vset.pattern.permute.xlu0 0
    %655 = vperm.xlu0 %654, %v649
    %v656 = vpop.permute.xlu0 %655
    %659 = vset.pattern.permute.xlu0 0
    %660 = vperm.xlu0 %659, %v650
    %v661 = vpop.permute.xlu0 %660
    %664 = vset.pattern.permute.xlu0 0
    %665 = vperm.xlu0 %664, %v651
    %v666 = vpop.permute.xlu0 %665
    %669 = vset.pattern.permute.xlu0 0
    %670 = vperm.xlu0 %669, %v652
    %v671 = vpop.permute.xlu0 %670
    %vm673 = vcmask 261120
    %v675 = vsel %vm673, %v645, 0
    %v678 = vsel %vm673, %v646, 0
    %v681 = vsel %vm673, %v647, 0
    %v684 = vsel %vm673, %v648, 0
    %686 = vmatprep.subr.mxu0 0.0
    %687 = vmatpush1.msra.mxu0 0.0
    %688 = vmatprep.subr.mxu0 0.0
    %689 = vmatpush1.msra.mxu0 0.0
    %690 = vmatprep.subr.mxu0 0.0
    %691 = vmatpush1.msra.mxu0 0.0
    %692 = vmatprep.subr.mxu0 0.0
    %693 = vmatpush1.msra.mxu0 0.0
    %694 = vmatprep.subr.mxu0 0.0
    %695 = vmatpush1.msra.mxu0 0.0
    %696 = vmatprep.subr.mxu0 0.0
    %697 = vmatpush1.msra.mxu0 0.0
    %698 = vmatprep.subr.mxu0 0.0
    %699 = vmatpush1.msra.mxu0 0.0
    %700 = vmatprep.subr.mxu0 0.0
    %701 = vmatpush1.msra.mxu0 0.0
    %702 = vmatprep.subr.mxu0 0.0
    %703 = vmatpush1.msra.mxu0 0.0
    %704 = vmatprep.subr.mxu0 0.0
    %705 = vmatpush1.msra.mxu0 0.0
    %706 = vmatprep.subr.mxu0 0.0
    %707 = vmatpush1.msra.mxu0 0.0
    %708 = vmatprep.subr.mxu0 0.0
    %709 = vmatpush1.msra.mxu0 0.0
    %710 = vmatprep.subr.mxu0 0.0
    %711 = vmatpush1.msra.mxu0 %v644
    %712 = vmatprep.subr.mxu0 0.0
    %713 = vmatpush1.msra.mxu0 %v643
    %714 = vmatprep.subr.mxu0 0.0
    %715 = vmatpush1.msra.mxu0 %v642
    %716 = vmatprep.subr.mxu0 0.0
    %717 = vmatpush1.msra.mxu0 %v641
    %718 = vmatprep.subr.mxu0 0.0
    %719 = vmatpush2.msra.mxu0 0.0
    %720 = vmatprep.subr.mxu0 0.0
    %721 = vmatpush2.msra.mxu0 0.0
    %722 = vmatprep.subr.mxu0 0.0
    %723 = vmatpush2.msra.mxu0 0.0
    %724 = vmatprep.subr.mxu0 0.0
    %725 = vmatpush2.msra.mxu0 0.0
    %726 = vmatprep.subr.mxu0 0.0
    %727 = vmatpush2.msra.mxu0 0.0
    %728 = vmatprep.subr.mxu0 0.0
    %729 = vmatpush2.msra.mxu0 0.0
    %730 = vmatprep.subr.mxu0 0.0
    %731 = vmatpush2.msra.mxu0 0.0
    %732 = vmatprep.subr.mxu0 0.0
    %733 = vmatpush2.msra.mxu0 0.0
    %734 = vmatprep.subr.mxu0 0.0
    %735 = vmatpush2.msra.mxu0 0.0
    %736 = vmatprep.subr.mxu0 0.0
    %737 = vmatpush2.msra.mxu0 0.0
    %738 = vmatprep.subr.mxu0 0.0
    %739 = vmatpush2.msra.mxu0 0.0
    %740 = vmatprep.subr.mxu0 0.0
    %741 = vmatpush2.msra.mxu0 0.0
    %742 = vmatprep.subr.mxu0 0.0
    %743 = vmatpush2.msra.mxu0 0.0
    %744 = vmatprep.subr.mxu0 0.0
    %745 = vmatpush2.msra.mxu0 0.0
    %746 = vmatprep.subr.mxu0 0.0
    %747 = vmatpush2.msra.mxu0 0.0
    %748 = vmatprep.subr.mxu0 0.0
    %749 = vmatpush2.msra.mxu0 0.0
    %750 = vmatprep.mubr.f32.mxu0 0.0
    %751 = vmatmul.mubr.f32.gmra.mxu0 %v675
    %v752 = vpop.f32.mrf.mxu0
    %v753 = vadd.f32 %v656, %v752
    %v754 = vpop.f32.mrf.mxu0
    %755 = vmatprep.mubr.f32.mxu0 0.0
    %756 = vmatmul.mubr.f32.gmra.mxu0 %v678
    %v757 = vpop.f32.mrf.mxu0
    %v758 = vadd.f32 %v661, %v757
    %v759 = vpop.f32.mrf.mxu0
    %760 = vmatprep.mubr.f32.mxu0 0.0
    %761 = vmatmul.mubr.f32.gmra.mxu0 %v681
    %v762 = vpop.f32.mrf.mxu0
    %v763 = vadd.f32 %v666, %v762
    %v764 = vpop.f32.mrf.mxu0
    %765 = vmatprep.mubr.f32.mxu0 0.0
    %766 = vmatmul.mubr.f32.gmra.mxu0 %v684
    %v767 = vpop.f32.mrf.mxu0
    %v768 = vadd.f32 %v671, %v767
    %v769 = vpop.f32.mrf.mxu0
    %770 = vdwg.mxu0
    %v771 = vmax.f32 %v753, 0.0
    %v772 = vmax.f32 %v758, 0.0
    %v773 = vmax.f32 %v763, 0.0
    %v774 = vmax.f32 %v768, 0.0
    %v775 = vld [vmem:[%s6] sm:$0x1]
    %s776 = sld [smem:[#allocation2]]
    %v777 = vstv %s776
    %v779 = vsel %vm673, %v775, 0
    %781 = vmatprep.subr.mxu0 0.0
    %782 = vmatpush1.msra.mxu0 0.0
    %783 = vmatprep.subr.mxu0 0.0
    %784 = vmatpush1.msra.mxu0 0.0
    %785 = vmatprep.subr.mxu0 0.0
    %786 = vmatpush1.msra.mxu0 0.0
    %787 = vmatprep.subr.mxu0 0.0
    %788 = vmatpush1.msra.mxu0 0.0
    %789 = vmatprep.subr.mxu0 0.0
    %790 = vmatpush1.msra.mxu0 0.0
    %791 = vmatprep.subr.mxu0 0.0
    %792 = vmatpush1.msra.mxu0 0.0
    %793 = vmatprep.subr.mxu0 0.0
    %794 = vmatpush1.msra.mxu0 0.0
    %795 = vmatprep.subr.mxu0 0.0
    %796 = vmatpush1.msra.mxu0 0.0
    %797 = vmatprep.subr.mxu0 0.0
    %798 = vmatpush1.msra.mxu0 0.0
    %799 = vmatprep.subr.mxu0 0.0
    %800 = vmatpush1.msra.mxu0 0.0
    %801 = vmatprep.subr.mxu0 0.0
    %802 = vmatpush1.msra.mxu0 0.0
    %803 = vmatprep.subr.mxu0 0.0
    %804 = vmatpush1.msra.mxu0 0.0
    %805 = vmatprep.subr.mxu0 0.0
    %806 = vmatpush1.msra.mxu0 %v774
    %807 = vmatprep.subr.mxu0 0.0
    %808 = vmatpush1.msra.mxu0 %v773
    %809 = vmatprep.subr.mxu0 0.0
    %810 = vmatpush1.msra.mxu0 %v772
    %811 = vmatprep.subr.mxu0 0.0
    %812 = vmatpush1.msra.mxu0 %v771
    %813 = vmatprep.subr.mxu0 0.0
    %814 = vmatpush2.msra.mxu0 0.0
    %815 = vmatprep.subr.mxu0 0.0
    %816 = vmatpush2.msra.mxu0 0.0
    %817 = vmatprep.subr.mxu0 0.0
    %818 = vmatpush2.msra.mxu0 0.0
    %819 = vmatprep.subr.mxu0 0.0
    %820 = vmatpush2.msra.mxu0 0.0
    %821 = vmatprep.subr.mxu0 0.0
    %822 = vmatpush2.msra.mxu0 0.0
    %823 = vmatprep.subr.mxu0 0.0
    %824 = vmatpush2.msra.mxu0 0.0
    %825 = vmatprep.subr.mxu0 0.0
    %826 = vmatpush2.msra.mxu0 0.0
    %827 = vmatprep.subr.mxu0 0.0
    %828 = vmatpush2.msra.mxu0 0.0
    %829 = vmatprep.subr.mxu0 0.0
    %830 = vmatpush2.msra.mxu0 0.0
    %831 = vmatprep.subr.mxu0 0.0
    %832 = vmatpush2.msra.mxu0 0.0
    %833 = vmatprep.subr.mxu0 0.0
    %834 = vmatpush2.msra.mxu0 0.0
    %835 = vmatprep.subr.mxu0 0.0
    %836 = vmatpush2.msra.mxu0 0.0
    %837 = vmatprep.subr.mxu0 0.0
    %838 = vmatpush2.msra.mxu0 0.0
    %839 = vmatprep.subr.mxu0 0.0
    %840 = vmatpush2.msra.mxu0 0.0
    %841 = vmatprep.subr.mxu0 0.0
    %842 = vmatpush2.msra.mxu0 0.0
    %843 = vmatprep.subr.mxu0 0.0
    %844 = vmatpush2.msra.mxu0 0.0
    %845 = vmatprep.mubr.f32.mxu0 0.0
    %846 = vmatmul.mubr.f32.gmra.mxu0 %v779
    %v847 = vpop.f32.mrf.mxu0
    %v848 = vadd.f32 %v777, %v847
    %v849 = vpop.f32.mrf.mxu0
    %850 = vdwg.mxu0
    %851 = vst [vmem:[#allocation6] sm:$0x1] %v848
    // Predicated region
    $region38: #{tpu_custom_call.1} parent=1 // pred_check
      _
    $region39: #{tpu_custom_call.1} parent=1 // pred_check_branch
      %853 = sbr.rel (0) target = $region41
    $region40: #{tpu_custom_call.1} parent=1 // pred_region
      %s855 = ssub.s32 16, 16
      %856 = vsyncadd [#allocation5], %s855
      %s858 = sshll.u32 [#allocation6], 4
      %s859 = int_to_ptr.vmem [resolvable:$true] %s858
      %861 = dma.vmem_to_hbm [thread:$0]  %s859, 16, %s8, [#allocation5]
    $region41: #{tpu_custom_call.1} parent=1 // pred_fallthru
      _
    // Predicated region
    $region42: #{tpu_custom_call.1} parent=1 // pred_check
      _
    $region43: #{tpu_custom_call.1} parent=1 // pred_check_branch
      %863 = sbr.rel (0) target = $region45
    $region44: #{tpu_custom_call.1} parent=1 // pred_region
      %864 = dma.done [#allocation5], 16
    $region45: #{tpu_custom_call.1} parent=1 // pred_fallthru
      _
    %865 = vsyncpa [#allocation4], 1
    %866 = vsyncpa [#allocation5], 1

</llo_original>
